<compile_context>
chip_gen: v7x
topology: tpu7x:2x2x1
jax: 0.10.0
libtpu: 0.0.40
codegen_flags: <defaults>
</compile_context>

<pallas_src>
import functools

import jax
import jax.numpy as jnp
import numpy as np
from jax.experimental import pallas as pl
from jax.experimental.pallas import tpu as pltpu


# -----------------------------------------------------------------------------
# Kernel
# -----------------------------------------------------------------------------
def decoder_kernel(tok_ref, emb_ref, h0_ref, c0_ref,
                   wih_ref, whh_ref, bias_ref, wout_ref, bout_ref,
                   pred_ref, hn_ref, cn_ref,
                   h_scr, c_scr,
                   *, n_layers, hid_dim):
    """One decoder timestep per grid step; weights resident, state in VMEM scratch.

    tok_ref  : (1, B, 1) int32   token ids for this step
    emb_ref  : (V, IN_MAX) f32   embedding table (cols >= emb_dim zero)
    h0/c0    : (B, 2*L*H) f32    packed initial state, per layer [fwd | bwd]
    wih_ref  : (L, IN_MAX, 8H) bf16  fused input weights (gate cols i_f i_b f_f f_b g_f g_b o_f o_b)
    whh_ref  : (L, 2H, 8H)     bf16  fused block-diagonal hidden weights
    bias_ref : (L, 1, 8H)      f32   (b_ih + b_hh, fused)
    wout_ref : (2H, O_PAD)     bf16
    bout_ref : (1, O_PAD)      f32
    pred_ref : (1, B, O_PAD)   f32   prediction for this step
    hn/cn    : (B, 2*L*H)      f32   packed final state (written at last step)
    """
    t = pl.program_id(0)
    last = pl.num_programs(0) - 1
    B = tok_ref.shape[1]
    V = emb_ref.shape[0]
    in_max = wih_ref.shape[1]
    H = hid_dim
    H2 = 2 * H

    # Load the initial state into the resident VMEM scratch once.
    @pl.when(t == 0)
    def _():
        h_scr[...] = h0_ref[...]
        c_scr[...] = c0_ref[...]

    # ---- Embedding lookup as one-hot matmul (MXU) ----
    tok = tok_ref[0]                                               # (B, 1)
    iota = jax.lax.broadcasted_iota(jnp.int32, (B, V), 1)          # (B, V)
    onehot = (iota == tok).astype(jnp.float32)
    x = jnp.dot(onehot, emb_ref[...],
                preferred_element_type=jnp.float32)                # (B, IN_MAX)
    # dropout(embedded): identity in eval mode.

    h_all = h_scr[...]                                             # (B, 2*L*H)
    c_all = c_scr[...]

    layer_in = x
    h_list, c_list = [], []
    for layer in range(n_layers):
        h = h_all[:, layer * H2:(layer + 1) * H2]                  # (B, 2H) [fwd|bwd]
        c = c_all[:, layer * H2:(layer + 1) * H2]
        gates = (jnp.dot(layer_in.astype(jnp.bfloat16), wih_ref[layer],
                         preferred_element_type=jnp.float32)
                 + jnp.dot(h.astype(jnp.bfloat16), whh_ref[layer],
                           preferred_element_type=jnp.float32)
                 + bias_ref[layer])                                # (B, 8H)
        # Fused gate layout: [i | f | g | o], each (B, 2H) = [fwd | bwd].
        i_g = jax.nn.sigmoid(gates[:, 0 * H2:1 * H2])
        f_g = jax.nn.sigmoid(gates[:, 1 * H2:2 * H2])
        g_g = jnp.tanh(gates[:, 2 * H2:3 * H2])
        o_g = jax.nn.sigmoid(gates[:, 3 * H2:4 * H2])
        c_new = f_g * c + i_g * g_g                                # (B, 2H)
        h_new = o_g * jnp.tanh(c_new)                              # (B, 2H) [fwd|bwd]
        h_list.append(h_new)
        c_list.append(c_new)
        # inter-layer LSTM dropout: identity in eval mode.
        if H2 < in_max:
            layer_in = jnp.concatenate(
                [h_new, jnp.zeros((B, in_max - H2), jnp.float32)], axis=1)
        else:
            layer_in = h_new

    h_cat = h_list[0] if n_layers == 1 else jnp.concatenate(h_list, axis=1)
    c_cat = c_list[0] if n_layers == 1 else jnp.concatenate(c_list, axis=1)
    h_scr[...] = h_cat                                             # full-width store
    c_scr[...] = c_cat

    # Output projection on the top layer's [fwd|bwd] output (lane-padded to O_PAD).
    pred_ref[0] = (jnp.dot(h_list[-1].astype(jnp.bfloat16), wout_ref[...],
                           preferred_element_type=jnp.float32)
                   + bout_ref[...])

    @pl.when(t == last)
    def _():
        hn_ref[...] = h_cat
        cn_ref[...] = c_cat


# -----------------------------------------------------------------------------
# State packing helpers: PyTorch (2L, B, H) <-> lane-dense (B, 2L*H)
# -----------------------------------------------------------------------------
def pack_state(s):
    l2, b, h = s.shape
    return jnp.transpose(s, (1, 0, 2)).reshape(b, l2 * h)


def unpack_state(p, n_layers, hid_dim):
    b = p.shape[0]
    return jnp.transpose(p.reshape(b, 2 * n_layers, hid_dim), (1, 0, 2))


# -----------------------------------------------------------------------------
# Wrappers
# -----------------------------------------------------------------------------
@functools.partial(jax.jit, static_argnames=("n_layers", "hid_dim", "output_dim"))
def decoder_decode(tokens_seq, hidden, cell, params, *, n_layers, hid_dim,
                   output_dim):
    """Run T sequential decoder steps (== T PyTorch forward calls) in one kernel."""
    T, B = tokens_seq.shape
    H = hid_dim
    L = n_layers
    o_pad = params["wout"].shape[1]
    packed = 2 * L * H

    tok3 = tokens_seq.reshape(T, B, 1).astype(jnp.int32)
    h_packed = pack_state(hidden)
    c_packed = pack_state(cell)

    kernel = functools.partial(decoder_kernel, n_layers=L, hid_dim=H)

    def resident(shape):
        # Whole array, same block every step -> stays in VMEM, DMA'd once.
        return pl.BlockSpec(shape, lambda t, _s=shape: (0,) * len(_s))

    grid_spec = pltpu.PrefetchScalarGridSpec(
        num_scalar_prefetch=0,
        grid=(T,),
        in_specs=[
            pl.BlockSpec((1, B, 1), lambda t: (t, 0, 0)),          # tokens (per step)
            resident(params["emb"].shape),                         # embedding
            resident((B, packed)),                                 # h0
            resident((B, packed)),                                 # c0
            resident(params["wih"].shape),
            resident(params["whh"].shape),
            resident(params["bias"].shape),
            resident(params["wout"].shape),
            resident(params["bout"].shape),
        ],
        out_specs=(
            pl.BlockSpec((1, B, o_pad), lambda t: (t, 0, 0)),      # pred per step
            resident((B, packed)),                                 # hn (written at end)
            resident((B, packed)),                                 # cn
        ),
        scratch_shapes=[pltpu.VMEM((B, packed), jnp.float32),
                        pltpu.VMEM((B, packed), jnp.float32)],
    )

    pred_pad, hn_p, cn_p = pl.pallas_call(
        kernel,
        out_shape=(
            jax.ShapeDtypeStruct((T, B, o_pad), jnp.float32),
            jax.ShapeDtypeStruct((B, packed), jnp.float32),
            jax.ShapeDtypeStruct((B, packed), jnp.float32),
        ),
        grid_spec=grid_spec,
        input_output_aliases={2: 1, 3: 2},                         # h/c update in place
        compiler_params=pltpu.CompilerParams(
            dimension_semantics=("arbitrary",)),
    )(tok3, params["emb"], h_packed, c_packed,
      params["wih"], params["whh"], params["bias"],
      params["wout"], params["bout"])

    preds = pred_pad[:, :, :output_dim]
    return preds, unpack_state(hn_p, L, H), unpack_state(cn_p, L, H)


def decoder_forward(tokens, hidden, cell, params, *, n_layers, hid_dim,
                    output_dim):
    """Single-step forward, exactly the PyTorch Decoder.forward semantics."""
    preds, hn, cn = decoder_decode(tokens.reshape(1, -1), hidden, cell, params,
                                   n_layers=n_layers, hid_dim=hid_dim,
                                   output_dim=output_dim)
    return preds[0], hn, cn


# -----------------------------------------------------------------------------
# Parameter construction (fused / packed / padded offline)
# -----------------------------------------------------------------------------
def init_params(key, output_dim, emb_dim, hid_dim, n_layers):
    H = hid_dim
    in_max = max(emb_dim, 2 * H)
    o_pad = ((output_dim + 127) // 128) * 128
    std = 1.0 / np.sqrt(H)
    keys = iter(jax.random.split(key, 8 * n_layers + 3))

    emb = jax.random.normal(next(keys), (output_dim, emb_dim), jnp.float32) * 0.1
    emb_pad = jnp.zeros((output_dim, in_max), jnp.float32).at[:, :emb_dim].set(emb)

    wih_list, whh_list, bias_list = [], [], []
    for layer in range(n_layers):
        in_sz = emb_dim if layer == 0 else 2 * H
        w_ih_f = jnp.zeros((in_max, 8 * H), jnp.float32)
        w_hh_f = jnp.zeros((2 * H, 8 * H), jnp.float32)
        b_f = jnp.zeros((1, 8 * H), jnp.float32)
        for d in range(2):                                  # 0 = fwd, 1 = bwd
            w_ih = jax.random.uniform(next(keys), (4 * H, in_sz),
                                      jnp.float32, -std, std)
            w_hh = jax.random.uniform(next(keys), (4 * H, H),
                                      jnp.float32, -std, std)
            b_ih = jax.random.uniform(next(keys), (4 * H,), jnp.float32, -std, std)
            b_hh = jax.random.uniform(next(keys), (4 * H,), jnp.float32, -std, std)
            b_sum = b_ih + b_hh
            for g in range(4):                              # PyTorch gate order i,f,g,o
                col = (2 * g + d) * H
                w_ih_f = w_ih_f.at[:in_sz, col:col + H].set(
                    w_ih[g * H:(g + 1) * H, :].T)
                w_hh_f = w_hh_f.at[d * H:(d + 1) * H, col:col + H].set(
                    w_hh[g * H:(g + 1) * H, :].T)
                b_f = b_f.at[0, col:col + H].set(b_sum[g * H:(g + 1) * H])
        wih_list.append(w_ih_f)
        whh_list.append(w_hh_f)
        bias_list.append(b_f)

    w_out = jax.random.uniform(next(keys), (output_dim, 2 * H),
                               jnp.float32, -std, std)
    b_out = jax.random.uniform(next(keys), (output_dim,), jnp.float32, -std, std)
    wout_pad = jnp.zeros((2 * H, o_pad), jnp.float32).at[:, :output_dim].set(w_out.T)
    bout_pad = jnp.zeros((1, o_pad), jnp.float32).at[0, :output_dim].set(b_out)

    return dict(
        emb=emb_pad,                                            # (V, IN_MAX) f32
        wih=jnp.stack(wih_list).astype(jnp.bfloat16),           # (L, IN_MAX, 8H)
        whh=jnp.stack(whh_list).astype(jnp.bfloat16),           # (L, 2H, 8H)
        bias=jnp.stack(bias_list),                              # (L, 1, 8H) f32
        wout=wout_pad.astype(jnp.bfloat16),                     # (2H, O_PAD)
        bout=bout_pad,                                          # (1, O_PAD) f32
    )


# -----------------------------------------------------------------------------
# Pure-JAX reference (identical bf16 casts) for validation
# -----------------------------------------------------------------------------
def reference_step(tok, h_packed, c_packed, p, *, n_layers, hid_dim):
    B = tok.shape[0]
    H = hid_dim
    H2 = 2 * H
    V, in_max = p["emb"].shape
    onehot = jax.nn.one_hot(tok, V, dtype=jnp.float32)
    x = jnp.dot(onehot, p["emb"], preferred_element_type=jnp.float32)
    layer_in = x
    h_out, c_out = [], []
    for layer in range(n_layers):
        h = h_packed[:, layer * H2:(layer + 1) * H2]
        c = c_packed[:, layer * H2:(layer + 1) * H2]
        gates = (jnp.dot(layer_in.astype(jnp.bfloat16), p["wih"][layer],
                         preferred_element_type=jnp.float32)
                 + jnp.dot(h.astype(jnp.bfloat16), p["whh"][layer],
                           preferred_element_type=jnp.float32)
                 + p["bias"][layer])
        i_g = jax.nn.sigmoid(gates[:, 0 * H2:1 * H2])
        f_g = jax.nn.sigmoid(gates[:, 1 * H2:2 * H2])
        g_g = jnp.tanh(gates[:, 2 * H2:3 * H2])
        o_g = jax.nn.sigmoid(gates[:, 3 * H2:4 * H2])
        c_new = f_g * c + i_g * g_g
        h_new = o_g * jnp.tanh(c_new)
        h_out.append(h_new)
        c_out.append(c_new)
        if H2 < in_max:
            layer_in = jnp.concatenate(
                [h_new, jnp.zeros((B, in_max - H2), jnp.float32)], axis=1)
        else:
            layer_in = h_new
    pred = (jnp.dot(h_out[-1].astype(jnp.bfloat16), p["wout"],
                    preferred_element_type=jnp.float32) + p["bout"])
    return pred, jnp.concatenate(h_out, axis=1), jnp.concatenate(c_out, axis=1)


def reference_decode(tokens_seq, hidden, cell, p, *, n_layers, hid_dim, output_dim):
    h_p = pack_state(hidden)
    c_p = pack_state(cell)
    preds = []
    for t in range(tokens_seq.shape[0]):
        pred, h_p, c_p = reference_step(tokens_seq[t], h_p, c_p, p,
                                        n_layers=n_layers, hid_dim=hid_dim)
        preds.append(pred[:, :output_dim])
    return (jnp.stack(preds),
            unpack_state(h_p, n_layers, hid_dim),
            unpack_state(c_p, n_layers, hid_dim))


# -----------------------------------------------------------------------------
if __name__ == "__main__":
    # Decoder(output_dim=64, emb_dim=32, hid_dim=32, n_layers=2, dropout=0.1)
    output_dim, emb_dim, hid_dim, n_layers = 64, 32, 32, 2
    batch, steps = 8, 6

    key = jax.random.PRNGKey(0)
    k_tok, k_h, k_c, k_p = jax.random.split(key, 4)
    tokens_seq = jax.random.randint(k_tok, (steps, batch), 0, output_dim, jnp.int32)
    hidden = jax.random.normal(k_h, (2 * n_layers, batch, hid_dim), jnp.float32)
    cell = jax.random.normal(k_c, (2 * n_layers, batch, hid_dim), jnp.float32)
    params = init_params(k_p, output_dim, emb_dim, hid_dim, n_layers)

    # Single step == the PyTorch module forward.
    pred1, h1, c1 = decoder_forward(tokens_seq[0], hidden, cell, params,
                                    n_layers=n_layers, hid_dim=hid_dim,
                                    output_dim=output_dim)
    # Multi-step decode: weights resident / state carried in VMEM across the grid.
    preds, hn, cn = decoder_decode(tokens_seq, hidden, cell, params,
                                   n_layers=n_layers, hid_dim=hid_dim,
                                   output_dim=output_dim)
    jax.block_until_ready((pred1, h1, c1, preds, hn, cn))

    ref_p1, ref_h1, ref_c1 = reference_decode(
        tokens_seq[:1], hidden, cell, params, n_layers=n_layers,
        hid_dim=hid_dim, output_dim=output_dim)
    ref_pT, ref_hT, ref_cT = reference_decode(
        tokens_seq, hidden, cell, params, n_layers=n_layers,
        hid_dim=hid_dim, output_dim=output_dim)

    assert pred1.shape == (batch, output_dim)
    assert h1.shape == (2 * n_layers, batch, hid_dim)
    assert c1.shape == (2 * n_layers, batch, hid_dim)
    assert preds.shape == (steps, batch, output_dim)

    tol = dict(atol=2e-2, rtol=2e-2)
    assert np.allclose(np.asarray(pred1), np.asarray(ref_p1[0]), **tol)
    assert np.allclose(np.asarray(h1), np.asarray(ref_h1), **tol)
    assert np.allclose(np.asarray(c1), np.asarray(ref_c1), **tol)
    assert np.allclose(np.asarray(preds), np.asarray(ref_pT), **tol)
    assert np.allclose(np.asarray(hn), np.asarray(ref_hT), **tol)
    assert np.allclose(np.asarray(cn), np.asarray(ref_cT), **tol)

    print("KERNEL_OK")
</pallas_src>

<mosaic_0001>
module attributes {stable_mosaic.version = 11 : i64} {
  func.func @decoder_kernel(%arg0: i32, %arg1: memref<1x8x1xi32, #tpu.memory_space<vmem>>, %arg2: memref<64x64xf32, #tpu.memory_space<vmem>>, %arg3: memref<8x128xf32, #tpu.memory_space<vmem>>, %arg4: memref<8x128xf32, #tpu.memory_space<vmem>>, %arg5: memref<2x64x256xbf16, #tpu.memory_space<vmem>>, %arg6: memref<2x64x256xbf16, #tpu.memory_space<vmem>>, %arg7: memref<2x1x256xf32, #tpu.memory_space<vmem>>, %arg8: memref<64x128xbf16, #tpu.memory_space<vmem>>, %arg9: memref<1x128xf32, #tpu.memory_space<vmem>>, %arg10: memref<1x8x128xf32, #tpu.memory_space<vmem>>, %arg11: memref<8x128xf32, #tpu.memory_space<vmem>>, %arg12: memref<8x128xf32, #tpu.memory_space<vmem>>, %arg13: memref<8x128xf32, #tpu.memory_space<vmem>>, %arg14: memref<8x128xf32, #tpu.memory_space<vmem>>) attributes {dimension_semantics = [#tpu.dimension_semantics<arbitrary>], iteration_bounds = array<i64: 1>, scalar_prefetch = 0 : i64, scratch_operands = 2 : i64, tpu.core_type = #tpu.core_type<tc>, window_params = [{transform_indices = @transform_0, window_bounds = array<i64: 1, 8, 1>}, {pipeline_mode = #tpu.pipeline_mode<synchronous>, transform_indices = @transform_1, window_bounds = array<i64: 64, 64>}, {pipeline_mode = #tpu.pipeline_mode<synchronous>, transform_indices = @transform_2, window_bounds = array<i64: 8, 128>}, {pipeline_mode = #tpu.pipeline_mode<synchronous>, transform_indices = @transform_3, window_bounds = array<i64: 8, 128>}, {pipeline_mode = #tpu.pipeline_mode<synchronous>, transform_indices = @transform_4, window_bounds = array<i64: 2, 64, 256>}, {pipeline_mode = #tpu.pipeline_mode<synchronous>, transform_indices = @transform_5, window_bounds = array<i64: 2, 64, 256>}, {pipeline_mode = #tpu.pipeline_mode<synchronous>, transform_indices = @transform_6, window_bounds = array<i64: 2, 1, 256>}, {pipeline_mode = #tpu.pipeline_mode<synchronous>, transform_indices = @transform_7, window_bounds = array<i64: 64, 128>}, {pipeline_mode = #tpu.pipeline_mode<synchronous>, transform_indices = @transform_8, window_bounds = array<i64: 1, 128>}, {transform_indices = @transform_9, window_bounds = array<i64: 1, 8, 128>}, {pipeline_mode = #tpu.pipeline_mode<synchronous>, transform_indices = @transform_10, window_bounds = array<i64: 8, 128>}, {pipeline_mode = #tpu.pipeline_mode<synchronous>, transform_indices = @transform_11, window_bounds = array<i64: 8, 128>}]} {
    %c0_i32 = arith.constant 0 : i32
    %0 = arith.cmpi eq, %arg0, %c0_i32 : i32
    %1 = arith.extui %0 : i1 to i32
    %c0_i32_0 = arith.constant 0 : i32
    %2 = arith.cmpi ne, %1, %c0_i32_0 : i32
    scf.if %2 {
      %c0_50 = arith.constant 0 : index
      %c0_51 = arith.constant 0 : index
      %110 = vector.load %arg3[%c0_50, %c0_51] : memref<8x128xf32, #tpu.memory_space<vmem>>, vector<8x128xf32>
      %c0_52 = arith.constant 0 : index
      %c0_53 = arith.constant 0 : index
      %111 = vector.load %arg13[%c0_52, %c0_53] : memref<8x128xf32, #tpu.memory_space<vmem>>, vector<8x128xf32>
      tpu.vector_store %arg13[%c0_52, %c0_53], %110 {strides = array<i32>} : memref<8x128xf32, #tpu.memory_space<vmem>>, vector<8x128xf32>,
      %c0_54 = arith.constant 0 : index
      %c0_55 = arith.constant 0 : index
      %112 = vector.load %arg4[%c0_54, %c0_55] : memref<8x128xf32, #tpu.memory_space<vmem>>, vector<8x128xf32>
      %c0_56 = arith.constant 0 : index
      %c0_57 = arith.constant 0 : index
      %113 = vector.load %arg14[%c0_56, %c0_57] : memref<8x128xf32, #tpu.memory_space<vmem>>, vector<8x128xf32>
      tpu.vector_store %arg14[%c0_56, %c0_57], %112 {strides = array<i32>} : memref<8x128xf32, #tpu.memory_space<vmem>>, vector<8x128xf32>,
    } else {
    }
    %c0 = arith.constant 0 : index
    %c0_1 = arith.constant 0 : index
    %c0_2 = arith.constant 0 : index
    %3 = vector.load %arg1[%c0, %c0_1, %c0_2] : memref<1x8x1xi32, #tpu.memory_space<vmem>>, vector<1x8x1xi32>
    %4 = vector.shape_cast %3 : vector<1x8x1xi32> to vector<8x1xi32>
    %5 = tpu.iota {dimensions = array<i32: 1>} : vector<8x64xi32>
    %6 = vector.broadcast %4 : vector<8x1xi32> to vector<8x64xi32>
    %7 = arith.cmpi eq, %5, %6 : vector<8x64xi32>
    %8 = arith.extui %7 : vector<8x64xi1> to vector<8x64xi32>
    %9 = arith.sitofp %8 : vector<8x64xi32> to vector<8x64xf32>
    %c0_3 = arith.constant 0 : index
    %c0_4 = arith.constant 0 : index
    %10 = vector.load %arg2[%c0_3, %c0_4] : memref<64x64xf32, #tpu.memory_space<vmem>>, vector<64x64xf32>
    %cst = arith.constant dense<0.000000e+00> : vector<8x64xf32>
    %11 = tpu.matmul %9, %10, %cst {dimension_numbers = #tpu.dot_dimension_numbers<[1], [0], [0], [1], [0, 0, 1, 1], [], []>} : vector<8x64xf32>, vector<64x64xf32>, vector<8x64xf32> -> vector<8x64xf32>
    %c0_5 = arith.constant 0 : index
    %c0_6 = arith.constant 0 : index
    %12 = vector.load %arg13[%c0_5, %c0_6] : memref<8x128xf32, #tpu.memory_space<vmem>>, vector<8x128xf32>
    %c0_7 = arith.constant 0 : index
    %c0_8 = arith.constant 0 : index
    %13 = vector.load %arg14[%c0_7, %c0_8] : memref<8x128xf32, #tpu.memory_space<vmem>>, vector<8x128xf32>
    %14 = vector.extract_strided_slice %12 {offsets = [0, 0], sizes = [8, 64], strides = [1, 1]} : vector<8x128xf32> to vector<8x64xf32>
    %15 = vector.extract_strided_slice %13 {offsets = [0, 0], sizes = [8, 64], strides = [1, 1]} : vector<8x128xf32> to vector<8x64xf32>
    %16 = arith.truncf %11 : vector<8x64xf32> to vector<8x64xbf16>
    %c0_9 = arith.constant 0 : index
    %c0_10 = arith.constant 0 : index
    %c0_11 = arith.constant 0 : index
    %17 = vector.load %arg5[%c0_9, %c0_10, %c0_11] : memref<2x64x256xbf16, #tpu.memory_space<vmem>>, vector<1x64x256xbf16>
    %18 = vector.shape_cast %17 : vector<1x64x256xbf16> to vector<64x256xbf16>
    %cst_12 = arith.constant dense<0.000000e+00> : vector<8x256xf32>
    %19 = tpu.matmul %16, %18, %cst_12 {dimension_numbers = #tpu.dot_dimension_numbers<[1], [0], [0], [1], [0, 0, 1, 1], [], []>} : vector<8x64xbf16>, vector<64x256xbf16>, vector<8x256xf32> -> vector<8x256xf32>
    %20 = arith.truncf %14 : vector<8x64xf32> to vector<8x64xbf16>
    %c0_13 = arith.constant 0 : index
    %c0_14 = arith.constant 0 : index
    %c0_15 = arith.constant 0 : index
    %21 = vector.load %arg6[%c0_13, %c0_14, %c0_15] : memref<2x64x256xbf16, #tpu.memory_space<vmem>>, vector<1x64x256xbf16>
    %22 = vector.shape_cast %21 : vector<1x64x256xbf16> to vector<64x256xbf16>
    %cst_16 = arith.constant dense<0.000000e+00> : vector<8x256xf32>
    %23 = tpu.matmul %20, %22, %cst_16 {dimension_numbers = #tpu.dot_dimension_numbers<[1], [0], [0], [1], [0, 0, 1, 1], [], []>} : vector<8x64xbf16>, vector<64x256xbf16>, vector<8x256xf32> -> vector<8x256xf32>
    %24 = arith.addf %19, %23 : vector<8x256xf32>
    %c0_17 = arith.constant 0 : index
    %c0_18 = arith.constant 0 : index
    %c0_19 = arith.constant 0 : index
    %25 = vector.load %arg7[%c0_17, %c0_18, %c0_19] : memref<2x1x256xf32, #tpu.memory_space<vmem>>, vector<1x1x256xf32>
    %26 = vector.shape_cast %25 : vector<1x1x256xf32> to vector<1x256xf32>
    %27 = vector.broadcast %26 : vector<1x256xf32> to vector<8x256xf32>
    %28 = arith.addf %24, %27 : vector<8x256xf32>
    %29 = vector.extract_strided_slice %28 {offsets = [0, 0], sizes = [8, 64], strides = [1, 1]} : vector<8x256xf32> to vector<8x64xf32>
    %30 = arith.negf %29 : vector<8x64xf32>
    %31 = math.exp %30 : vector<8x64xf32>
    %cst_20 = arith.constant 1.000000e+00 : f32
    %32 = vector.broadcast %cst_20 : f32 to vector<8x64xf32>
    %33 = arith.addf %32, %31 : vector<8x64xf32>
    %34 = arith.divf %32, %33 : vector<8x64xf32>
    %35 = vector.extract_strided_slice %28 {offsets = [0, 64], sizes = [8, 64], strides = [1, 1]} : vector<8x256xf32> to vector<8x64xf32>
    %36 = arith.negf %35 : vector<8x64xf32>
    %37 = math.exp %36 : vector<8x64xf32>
    %cst_21 = arith.constant 1.000000e+00 : f32
    %38 = vector.broadcast %cst_21 : f32 to vector<8x64xf32>
    %39 = arith.addf %38, %37 : vector<8x64xf32>
    %40 = arith.divf %38, %39 : vector<8x64xf32>
    %41 = vector.extract_strided_slice %28 {offsets = [0, 128], sizes = [8, 64], strides = [1, 1]} : vector<8x256xf32> to vector<8x64xf32>
    %42 = math.tanh %41 : vector<8x64xf32>
    %43 = vector.extract_strided_slice %28 {offsets = [0, 192], sizes = [8, 64], strides = [1, 1]} : vector<8x256xf32> to vector<8x64xf32>
    %44 = arith.negf %43 : vector<8x64xf32>
    %45 = math.exp %44 : vector<8x64xf32>
    %cst_22 = arith.constant 1.000000e+00 : f32
    %46 = vector.broadcast %cst_22 : f32 to vector<8x64xf32>
    %47 = arith.addf %46, %45 : vector<8x64xf32>
    %48 = arith.divf %46, %47 : vector<8x64xf32>
    %49 = arith.mulf %40, %15 : vector<8x64xf32>
    %50 = arith.mulf %34, %42 : vector<8x64xf32>
    %51 = arith.addf %49, %50 : vector<8x64xf32>
    %52 = math.tanh %51 : vector<8x64xf32>
    %53 = arith.mulf %48, %52 : vector<8x64xf32>
    %54 = vector.extract_strided_slice %12 {offsets = [0, 64], sizes = [8, 64], strides = [1, 1]} : vector<8x128xf32> to vector<8x64xf32>
    %55 = vector.extract_strided_slice %13 {offsets = [0, 64], sizes = [8, 64], strides = [1, 1]} : vector<8x128xf32> to vector<8x64xf32>
    %56 = arith.truncf %53 : vector<8x64xf32> to vector<8x64xbf16>
    %c1 = arith.constant 1 : index
    %c0_23 = arith.constant 0 : index
    %c0_24 = arith.constant 0 : index
    %57 = vector.load %arg5[%c1, %c0_23, %c0_24] : memref<2x64x256xbf16, #tpu.memory_space<vmem>>, vector<1x64x256xbf16>
    %58 = vector.shape_cast %57 : vector<1x64x256xbf16> to vector<64x256xbf16>
    %cst_25 = arith.constant dense<0.000000e+00> : vector<8x256xf32>
    %59 = tpu.matmul %56, %58, %cst_25 {dimension_numbers = #tpu.dot_dimension_numbers<[1], [0], [0], [1], [0, 0, 1, 1], [], []>} : vector<8x64xbf16>, vector<64x256xbf16>, vector<8x256xf32> -> vector<8x256xf32>
    %60 = arith.truncf %54 : vector<8x64xf32> to vector<8x64xbf16>
    %c1_26 = arith.constant 1 : index
    %c0_27 = arith.constant 0 : index
    %c0_28 = arith.constant 0 : index
    %61 = vector.load %arg6[%c1_26, %c0_27, %c0_28] : memref<2x64x256xbf16, #tpu.memory_space<vmem>>, vector<1x64x256xbf16>
    %62 = vector.shape_cast %61 : vector<1x64x256xbf16> to vector<64x256xbf16>
    %cst_29 = arith.constant dense<0.000000e+00> : vector<8x256xf32>
    %63 = tpu.matmul %60, %62, %cst_29 {dimension_numbers = #tpu.dot_dimension_numbers<[1], [0], [0], [1], [0, 0, 1, 1], [], []>} : vector<8x64xbf16>, vector<64x256xbf16>, vector<8x256xf32> -> vector<8x256xf32>
    %64 = arith.addf %59, %63 : vector<8x256xf32>
    %c1_30 = arith.constant 1 : index
    %c0_31 = arith.constant 0 : index
    %c0_32 = arith.constant 0 : index
    %65 = vector.load %arg7[%c1_30, %c0_31, %c0_32] : memref<2x1x256xf32, #tpu.memory_space<vmem>>, vector<1x1x256xf32>
    %66 = vector.shape_cast %65 : vector<1x1x256xf32> to vector<1x256xf32>
    %67 = vector.broadcast %66 : vector<1x256xf32> to vector<8x256xf32>
    %68 = arith.addf %64, %67 : vector<8x256xf32>
    %69 = vector.extract_strided_slice %68 {offsets = [0, 0], sizes = [8, 64], strides = [1, 1]} : vector<8x256xf32> to vector<8x64xf32>
    %70 = arith.negf %69 : vector<8x64xf32>
    %71 = math.exp %70 : vector<8x64xf32>
    %cst_33 = arith.constant 1.000000e+00 : f32
    %72 = vector.broadcast %cst_33 : f32 to vector<8x64xf32>
    %73 = arith.addf %72, %71 : vector<8x64xf32>
    %74 = arith.divf %72, %73 : vector<8x64xf32>
    %75 = vector.extract_strided_slice %68 {offsets = [0, 64], sizes = [8, 64], strides = [1, 1]} : vector<8x256xf32> to vector<8x64xf32>
    %76 = arith.negf %75 : vector<8x64xf32>
    %77 = math.exp %76 : vector<8x64xf32>
    %cst_34 = arith.constant 1.000000e+00 : f32
    %78 = vector.broadcast %cst_34 : f32 to vector<8x64xf32>
    %79 = arith.addf %78, %77 : vector<8x64xf32>
    %80 = arith.divf %78, %79 : vector<8x64xf32>
    %81 = vector.extract_strided_slice %68 {offsets = [0, 128], sizes = [8, 64], strides = [1, 1]} : vector<8x256xf32> to vector<8x64xf32>
    %82 = math.tanh %81 : vector<8x64xf32>
    %83 = vector.extract_strided_slice %68 {offsets = [0, 192], sizes = [8, 64], strides = [1, 1]} : vector<8x256xf32> to vector<8x64xf32>
    %84 = arith.negf %83 : vector<8x64xf32>
    %85 = math.exp %84 : vector<8x64xf32>
    %cst_35 = arith.constant 1.000000e+00 : f32
    %86 = vector.broadcast %cst_35 : f32 to vector<8x64xf32>
    %87 = arith.addf %86, %85 : vector<8x64xf32>
    %88 = arith.divf %86, %87 : vector<8x64xf32>
    %89 = arith.mulf %80, %55 : vector<8x64xf32>
    %90 = arith.mulf %74, %82 : vector<8x64xf32>
    %91 = arith.addf %89, %90 : vector<8x64xf32>
    %92 = math.tanh %91 : vector<8x64xf32>
    %93 = arith.mulf %88, %92 : vector<8x64xf32>
    %94 = tpu.concatenate %53, %93 in 1 : vector<8x64xf32>, vector<8x64xf32> -> vector<8x128xf32>
    %95 = tpu.concatenate %51, %91 in 1 : vector<8x64xf32>, vector<8x64xf32> -> vector<8x128xf32>
    %c0_36 = arith.constant 0 : index
    %c0_37 = arith.constant 0 : index
    %96 = vector.load %arg13[%c0_36, %c0_37] : memref<8x128xf32, #tpu.memory_space<vmem>>, vector<8x128xf32>
    tpu.vector_store %arg13[%c0_36, %c0_37], %94 {strides = array<i32>} : memref<8x128xf32, #tpu.memory_space<vmem>>, vector<8x128xf32>,
    %c0_38 = arith.constant 0 : index
    %c0_39 = arith.constant 0 : index
    %97 = vector.load %arg14[%c0_38, %c0_39] : memref<8x128xf32, #tpu.memory_space<vmem>>, vector<8x128xf32>
    tpu.vector_store %arg14[%c0_38, %c0_39], %95 {strides = array<i32>} : memref<8x128xf32, #tpu.memory_space<vmem>>, vector<8x128xf32>,
    %98 = arith.truncf %93 : vector<8x64xf32> to vector<8x64xbf16>
    %c0_40 = arith.constant 0 : index
    %c0_41 = arith.constant 0 : index
    %99 = vector.load %arg8[%c0_40, %c0_41] : memref<64x128xbf16, #tpu.memory_space<vmem>>, vector<64x128xbf16>
    %cst_42 = arith.constant dense<0.000000e+00> : vector<8x128xf32>
    %100 = tpu.matmul %98, %99, %cst_42 {dimension_numbers = #tpu.dot_dimension_numbers<[1], [0], [0], [1], [0, 0, 1, 1], [], []>} : vector<8x64xbf16>, vector<64x128xbf16>, vector<8x128xf32> -> vector<8x128xf32>
    %c0_43 = arith.constant 0 : index
    %c0_44 = arith.constant 0 : index
    %101 = vector.load %arg9[%c0_43, %c0_44] : memref<1x128xf32, #tpu.memory_space<vmem>>, vector<1x128xf32>
    %102 = vector.broadcast %101 : vector<1x128xf32> to vector<8x128xf32>
    %103 = arith.addf %100, %102 : vector<8x128xf32>
    %c0_45 = arith.constant 0 : index
    %c0_46 = arith.constant 0 : index
    %c0_47 = arith.constant 0 : index
    %104 = vector.load %arg10[%c0_45, %c0_46, %c0_47] : memref<1x8x128xf32, #tpu.memory_space<vmem>>, vector<1x8x128xf32>
    %105 = vector.shape_cast %104 : vector<1x8x128xf32> to vector<8x128xf32>
    %106 = vector.shape_cast %103 : vector<8x128xf32> to vector<1x8x128xf32>
    tpu.vector_store %arg10[%c0_45, %c0_46, %c0_47], %106 {strides = array<i32>} : memref<1x8x128xf32, #tpu.memory_space<vmem>>, vector<1x8x128xf32>,
    %c0_i32_48 = arith.constant 0 : i32
    %107 = arith.cmpi eq, %arg0, %c0_i32_48 : i32
    %108 = arith.extui %107 : i1 to i32
    %c0_i32_49 = arith.constant 0 : i32
    %109 = arith.cmpi ne, %108, %c0_i32_49 : i32
    scf.if %109 {
      %c0_50 = arith.constant 0 : index
      %c0_51 = arith.constant 0 : index
      %110 = vector.load %arg11[%c0_50, %c0_51] : memref<8x128xf32, #tpu.memory_space<vmem>>, vector<8x128xf32>
      tpu.vector_store %arg11[%c0_50, %c0_51], %94 {strides = array<i32>} : memref<8x128xf32, #tpu.memory_space<vmem>>, vector<8x128xf32>,
      %c0_52 = arith.constant 0 : index
      %c0_53 = arith.constant 0 : index
      %111 = vector.load %arg12[%c0_52, %c0_53] : memref<8x128xf32, #tpu.memory_space<vmem>>, vector<8x128xf32>
      tpu.vector_store %arg12[%c0_52, %c0_53], %95 {strides = array<i32>} : memref<8x128xf32, #tpu.memory_space<vmem>>, vector<8x128xf32>,
    } else {
    }
    return
  }
  func.func @transform_0(%arg0: i32) -> (i32, i32, i32) {
    %c0_i32 = arith.constant 0 : i32
    %c0_i32_0 = arith.constant 0 : i32
    %c0_i32_1 = arith.constant 0 : i32
    return %arg0, %c0_i32, %c0_i32_0 : i32, i32, i32
  }
  func.func @transform_1(%arg0: i32) -> (i32, i32) {
    %c0_i32 = arith.constant 0 : i32
    %c0_i32_0 = arith.constant 0 : i32
    %c0_i32_1 = arith.constant 0 : i32
    return %c0_i32, %c0_i32_0 : i32, i32
  }
  func.func @transform_2(%arg0: i32) -> (i32, i32) {
    %c0_i32 = arith.constant 0 : i32
    %c0_i32_0 = arith.constant 0 : i32
    %c0_i32_1 = arith.constant 0 : i32
    return %c0_i32, %c0_i32_0 : i32, i32
  }
  func.func @transform_3(%arg0: i32) -> (i32, i32) {
    %c0_i32 = arith.constant 0 : i32
    %c0_i32_0 = arith.constant 0 : i32
    %c0_i32_1 = arith.constant 0 : i32
    return %c0_i32, %c0_i32_0 : i32, i32
  }
  func.func @transform_4(%arg0: i32) -> (i32, i32, i32) {
    %c0_i32 = arith.constant 0 : i32
    %c0_i32_0 = arith.constant 0 : i32
    %c0_i32_1 = arith.constant 0 : i32
    %c0_i32_2 = arith.constant 0 : i32
    return %c0_i32, %c0_i32_0, %c0_i32_1 : i32, i32, i32
  }
  func.func @transform_5(%arg0: i32) -> (i32, i32, i32) {
    %c0_i32 = arith.constant 0 : i32
    %c0_i32_0 = arith.constant 0 : i32
    %c0_i32_1 = arith.constant 0 : i32
    %c0_i32_2 = arith.constant 0 : i32
    return %c0_i32, %c0_i32_0, %c0_i32_1 : i32, i32, i32
  }
  func.func @transform_6(%arg0: i32) -> (i32, i32, i32) {
    %c0_i32 = arith.constant 0 : i32
    %c0_i32_0 = arith.constant 0 : i32
    %c0_i32_1 = arith.constant 0 : i32
    %c0_i32_2 = arith.constant 0 : i32
    return %c0_i32, %c0_i32_0, %c0_i32_1 : i32, i32, i32
  }
  func.func @transform_7(%arg0: i32) -> (i32, i32) {
    %c0_i32 = arith.constant 0 : i32
    %c0_i32_0 = arith.constant 0 : i32
    %c0_i32_1 = arith.constant 0 : i32
    return %c0_i32, %c0_i32_0 : i32, i32
  }
  func.func @transform_8(%arg0: i32) -> (i32, i32) {
    %c0_i32 = arith.constant 0 : i32
    %c0_i32_0 = arith.constant 0 : i32
    %c0_i32_1 = arith.constant 0 : i32
    return %c0_i32, %c0_i32_0 : i32, i32
  }
  func.func @transform_9(%arg0: i32) -> (i32, i32, i32) {
    %c0_i32 = arith.constant 0 : i32
    %c0_i32_0 = arith.constant 0 : i32
    %c0_i32_1 = arith.constant 0 : i32
    return %arg0, %c0_i32, %c0_i32_0 : i32, i32, i32
  }
  func.func @transform_10(%arg0: i32) -> (i32, i32) {
    %c0_i32 = arith.constant 0 : i32
    %c0_i32_0 = arith.constant 0 : i32
    %c0_i32_1 = arith.constant 0 : i32
    return %c0_i32, %c0_i32_0 : i32, i32
  }
  func.func @transform_11(%arg0: i32) -> (i32, i32) {
    %c0_i32 = arith.constant 0 : i32
    %c0_i32_0 = arith.constant 0 : i32
    %c0_i32_1 = arith.constant 0 : i32
    return %c0_i32, %c0_i32_0 : i32, i32
  }
}

</mosaic_0001>

<llo_original>
// kernel: decoder_decode.1
$region0: #{decoder_decode.1}
  #allocation0 [shape = 'u32[]', space=smem, size = 0x4, offset = 0x4, fixed_abs, tag = 'smem constant byte address 0x4 - core index']
  #allocation1 [shape = 'u32[144,128]{1,0:T(1,128)}', space=vmem, size = 0x12000, scoped, tag = 'internal scratch']
  #allocation2 [shape = 'f32[8,128]{1,0:T(8,128)}', space=vmem, size = 0x1000, scoped, tag = 'scratch operand']
  #allocation3 [shape = 'f32[8,128]{1,0:T(8,128)}', space=vmem, size = 0x1000, scoped, tag = 'scratch operand']
  %s0 = inlined_call_operand.vmem [shape: s32[1,8,1], index: 0, kind: input, shape index: {}]
  %s1 = inlined_call_operand.vmem [shape: f32[64,64], index: 1, kind: input, shape index: {}]
  %s2 = inlined_call_operand.vmem [shape: f32[8,128], index: 2, kind: input, shape index: {}, may-alias: {2,10}]
  %s3 = inlined_call_operand.vmem [shape: f32[8,128], index: 3, kind: input, shape index: {}, may-alias: {3,11}]
  %s4 = inlined_call_operand.vmem [shape: bf16[2,64,256], index: 4, kind: input, shape index: {}]
  %s5 = inlined_call_operand.hbm [shape: bf16[2,64,256], index: 5, kind: input, shape index: {}]
  %s6 = inlined_call_operand.vmem [shape: f32[2,1,256], index: 6, kind: input, shape index: {}]
  %s7 = inlined_call_operand.vmem [shape: bf16[64,128], index: 7, kind: input, shape index: {}]
  %s8 = inlined_call_operand.vmem [shape: f32[1,128], index: 8, kind: input, shape index: {}]
  %s9 = inlined_call_operand.hbm [shape: f32[1,8,128], index: 9, kind: output, shape index: {0}]
  %s10 = inlined_call_operand.vmem [shape: f32[8,128], index: 10, kind: output, shape index: {1}, may-alias: {2,10}]
  %s11 = inlined_call_operand.vmem [shape: f32[8,128], index: 11, kind: output, shape index: {2}, may-alias: {3,11}]
  %12 = xla_tuple %s9, %s10, %s11
  %s13 = sld [smem:[#allocation0]]
  $region74: #{decoder_decode.1} parent=0
    _
  %s15 = ssub.s32 1, %s13
  %s16 = scalar_select 0, %s15, %s13
  $region1: #{decoder_decode.1} parent=0
    #allocation4 [shape = 'u8[65536]{0}', space=vmem, size = 0x10000, scoped, tag = 'input window, operand 5, single buffered']
    #allocation5 [shape = 's32[1]{0}', space=sflag, size = 0x4, scoped, tag = 'scoped memory for decoder_decode.1']
    #allocation6 [shape = 's32[1]{0}', space=sflag, size = 0x4, scoped, tag = 'scoped memory for decoder_decode.1']
    #allocation7 [shape = 'u8[4096]{0}', space=vmem, size = 0x1000, scoped, tag = 'output window, operand 0, single buffered']
    %17 = vsyncpa [#allocation5], 0
    %18 = vsyncpa [#allocation6], 0
    // Predicated region
    $region2: #{decoder_decode.1} parent=1 // pred_check
      _
    $region3: #{decoder_decode.1} parent=1 // pred_check_branch
      %20 = sbr.rel (0) target = $region5
    $region4: #{decoder_decode.1} parent=1 // pred_region
      _
    $region5: #{decoder_decode.1} parent=1 // pred_fallthru
      _
    // Predicated region
    $region6: #{decoder_decode.1} parent=1 // pred_check
      _
    $region7: #{decoder_decode.1} parent=1 // pred_check_branch
      %22 = sbr.rel (0) target = $region9
    $region8: #{decoder_decode.1} parent=1 // pred_region
      _
    $region9: #{decoder_decode.1} parent=1 // pred_fallthru
      _
    // Predicated region
    $region10: #{decoder_decode.1} parent=1 // pred_check
      _
    $region11: #{decoder_decode.1} parent=1 // pred_check_branch
      %24 = sbr.rel (0) target = $region13
    $region12: #{decoder_decode.1} parent=1 // pred_region
      _
    $region13: #{decoder_decode.1} parent=1 // pred_fallthru
      _
    // Predicated region
    $region14: #{decoder_decode.1} parent=1 // pred_check
      _
    $region15: #{decoder_decode.1} parent=1 // pred_check_branch
      %26 = sbr.rel (0) target = $region17
    $region16: #{decoder_decode.1} parent=1 // pred_region
      _
    $region17: #{decoder_decode.1} parent=1 // pred_fallthru
      _
    // Predicated region
    $region18: #{decoder_decode.1} parent=1 // pred_check
      _
    $region19: #{decoder_decode.1} parent=1 // pred_check_branch
      %28 = sbr.rel (0) target = $region21
    $region20: #{decoder_decode.1} parent=1 // pred_region
      _
    $region21: #{decoder_decode.1} parent=1 // pred_fallthru
      _
    // Predicated region
    $region22: #{decoder_decode.1} parent=1 // pred_check
      _
    $region23: #{decoder_decode.1} parent=1 // pred_check_branch
      %30 = sbr.rel (0) target = $region25
    $region24: #{decoder_decode.1} parent=1 // pred_region
      %s32 = ssub.s32 2048, 2048
      %33 = vsyncadd [#allocation5], %s32
      %s34 = sshll.u32 [#allocation4], 4
      %s35 = int_to_ptr.vmem [resolvable:$true] %s34
      %40 = dma.hbm_to_vmem [thread:$0]  %s5, 2048, %s35, [#allocation5], 128, 128, 8
    $region25: #{decoder_decode.1} parent=1 // pred_fallthru
      _
    // Predicated region
    $region26: #{decoder_decode.1} parent=1 // pred_check
      _
    $region27: #{decoder_decode.1} parent=1 // pred_check_branch
      %42 = sbr.rel (0) target = $region29
    $region28: #{decoder_decode.1} parent=1 // pred_region
      _
    $region29: #{decoder_decode.1} parent=1 // pred_fallthru
      _
    // Predicated region
    $region30: #{decoder_decode.1} parent=1 // pred_check
      _
    $region31: #{decoder_decode.1} parent=1 // pred_check_branch
      %44 = sbr.rel (0) target = $region33
    $region32: #{decoder_decode.1} parent=1 // pred_region
      _
    $region33: #{decoder_decode.1} parent=1 // pred_fallthru
      _
    // Predicated region
    $region34: #{decoder_decode.1} parent=1 // pred_check
      _
    $region35: #{decoder_decode.1} parent=1 // pred_check_branch
      %46 = sbr.rel (0) target = $region37
    $region36: #{decoder_decode.1} parent=1 // pred_region
      _
    $region37: #{decoder_decode.1} parent=1 // pred_fallthru
      _
    // Predicated region
    $region38: #{decoder_decode.1} parent=1 // pred_check
      _
    $region39: #{decoder_decode.1} parent=1 // pred_check_branch
      %48 = sbr.rel (0) target = $region41
    $region40: #{decoder_decode.1} parent=1 // pred_region
      %49 = dma.done [#allocation5], 2048
    $region41: #{decoder_decode.1} parent=1 // pred_fallthru
      _
    %p51 = scmp.eq.s32.totalorder 0, 0
    // Predicated region
    $region42: #{decoder_decode.1} parent=1 // pred_check
      %p52 = pneg %p51
    $region43: #{decoder_decode.1} parent=1 // pred_check_branch
      %54 = sbr.rel (%p52) target = $region45
    $region44: #{decoder_decode.1} parent=1 // pred_region
      %v55 = vld [vmem:[%s2] sm:$0xff]
      %56 = vst [vmem:[#allocation2] sm:$0xff] %v55
      %v57 = vld [vmem:[%s3] sm:$0xff]
      %58 = vst [vmem:[#allocation3] sm:$0xff] %v57
    $region45: #{decoder_decode.1} parent=1 // pred_fallthru
      _
    %v59 = vld [vmem:[%s0] sm:$0xff]
    %v60 = vlaneseq
    %v61 = vand.u32 %v60, 127
    %62 = vset.pattern.permute.xlu0 0
    %63 = vperm.xlu0 %62, %v59
    %v64 = vpop.permute.xlu0 %63
    %vm65 = vcmp.eq.s32.totalorder %v61, %v64
    %v66 = vsel %vm65, 1, 0
    %v67 = vcvt.s32.f32 %v66
    %v68 = vld [vmem:[%s1] sm:$0xff]
    %v69 = vld [vmem:[%s1 + $0x8] sm:$0xff]
    %v70 = vld [vmem:[%s1 + $0x10] sm:$0xff]
    %v71 = vld [vmem:[%s1 + $0x18] sm:$0xff]
    %v72 = vld [vmem:[%s1 + $0x20] sm:$0xff]
    %v73 = vld [vmem:[%s1 + $0x28] sm:$0xff]
    %v74 = vld [vmem:[%s1 + $0x30] sm:$0xff]
    %v75 = vld [vmem:[%s1 + $0x38] sm:$0xff]
    %vm76 = vcmask 523264
    %v78 = vsel %vm76, %v67, 0
    %80 = vmatprep.subr.mxu0 0.0
    %81 = vmatpush1.msra.mxu0 %v68
    %82 = vmatprep.subr.mxu0 0.0
    %83 = vmatpush1.msra.mxu0 %v69
    %84 = vmatprep.subr.mxu0 0.0
    %85 = vmatpush1.msra.mxu0 %v70
    %86 = vmatprep.subr.mxu0 0.0
    %87 = vmatpush1.msra.mxu0 %v71
    %88 = vmatprep.subr.mxu0 0.0
    %89 = vmatpush1.msra.mxu0 %v72
    %90 = vmatprep.subr.mxu0 0.0
    %91 = vmatpush1.msra.mxu0 %v73
    %92 = vmatprep.subr.mxu0 0.0
    %93 = vmatpush1.msra.mxu0 %v74
    %94 = vmatprep.subr.mxu0 0.0
    %95 = vmatpush1.msra.mxu0 %v75
    %96 = vmatprep.subr.mxu0 0.0
    %97 = vmatpush1.msra.mxu0 0.0
    %98 = vmatprep.subr.mxu0 0.0
    %99 = vmatpush1.msra.mxu0 0.0
    %100 = vmatprep.subr.mxu0 0.0
    %101 = vmatpush1.msra.mxu0 0.0
    %102 = vmatprep.subr.mxu0 0.0
    %103 = vmatpush1.msra.mxu0 0.0
    %104 = vmatprep.subr.mxu0 0.0
    %105 = vmatpush1.msra.mxu0 0.0
    %106 = vmatprep.subr.mxu0 0.0
    %107 = vmatpush1.msra.mxu0 0.0
    %108 = vmatprep.subr.mxu0 0.0
    %109 = vmatpush1.msra.mxu0 0.0
    %110 = vmatprep.subr.mxu0 0.0
    %111 = vmatpush1.msra.mxu0 0.0
    %112 = vmatprep.subr.mxu0 0.0
    %113 = vmatpush1.msra.mxu0 0.0
    %114 = vmatprep.subr.mxu0 0.0
    %115 = vmatpush1.msra.mxu0 0.0
    %116 = vmatprep.subr.mxu0 0.0
    %117 = vmatpush1.msra.mxu0 0.0
    %118 = vmatprep.subr.mxu0 0.0
    %119 = vmatpush1.msra.mxu0 0.0
    %120 = vmatprep.subr.mxu0 0.0
    %121 = vmatpush1.msra.mxu0 0.0
    %122 = vmatprep.subr.mxu0 0.0
    %123 = vmatpush1.msra.mxu0 0.0
    %124 = vmatprep.subr.mxu0 0.0
    %125 = vmatpush1.msra.mxu0 0.0
    %126 = vmatprep.subr.mxu0 0.0
    %127 = vmatpush1.msra.mxu0 0.0
    %128 = vmatprep.subr.mxu0 0.0
    %129 = vmatpush1.msra.mxu0 0.0
    %130 = vmatprep.subr.mxu0 0.0
    %131 = vmatpush1.msra.mxu0 0.0
    %132 = vmatprep.subr.mxu0 0.0
    %133 = vmatpush1.msra.mxu0 0.0
    %134 = vmatprep.subr.mxu0 0.0
    %135 = vmatpush1.msra.mxu0 0.0
    %136 = vmatprep.subr.mxu0 0.0
    %137 = vmatpush1.msra.mxu0 0.0
    %138 = vmatprep.subr.mxu0 0.0
    %139 = vmatpush1.msra.mxu0 0.0
    %140 = vmatprep.subr.mxu0 0.0
    %141 = vmatpush1.msra.mxu0 0.0
    %142 = vmatprep.subr.mxu0 0.0
    %143 = vmatpush1.msra.mxu0 0.0
    %144 = vmatprep.mubr.f32.mxu0 0.0
    %145 = vmatmul.mubr.f32.gmra.mrb[0].mxu0 %v78
    %v146 = vpop.f32.mrb[0].mxu0
    %v147 = vadd.f32 0.0, %v146
    %v148 = vpop.f32.mrb[0].mxu0
    %149 = vdwg.mxu0
    %v150 = vld [vmem:[#allocation2] sm:$0xff]
    %v151 = vld [vmem:[#allocation3] sm:$0xff]
    %v152 = vpack.c.bf16 %v147, %v147
    %v153 = vld [vmem:[%s4] sm:$0xff]
    %v154 = vld [vmem:[%s4 + $0x8] sm:$0xff]
    %v155 = vld [vmem:[%s4 + $0x10] sm:$0xff]
    %v156 = vld [vmem:[%s4 + $0x18] sm:$0xff]
    %v157 = vld [vmem:[%s4 + $0x20] sm:$0xff]
    %v158 = vld [vmem:[%s4 + $0x28] sm:$0xff]
    %v159 = vld [vmem:[%s4 + $0x30] sm:$0xff]
    %v160 = vld [vmem:[%s4 + $0x38] sm:$0xff]
    %v161 = vpack.c.bf16 %v150, %v150
    %v162 = vld [vmem:[#allocation4] sm:$0xff]
    %v163 = vld [vmem:[#allocation4 + $0x8] sm:$0xff]
    %v164 = vld [vmem:[#allocation4 + $0x10] sm:$0xff]
    %v165 = vld [vmem:[#allocation4 + $0x18] sm:$0xff]
    %v166 = vld [vmem:[#allocation4 + $0x20] sm:$0xff]
    %v167 = vld [vmem:[#allocation4 + $0x28] sm:$0xff]
    %v168 = vld [vmem:[#allocation4 + $0x30] sm:$0xff]
    %v169 = vld [vmem:[#allocation4 + $0x38] sm:$0xff]
    %v178 = vunpack.c.l.b16 %v162
    %v179 = vunpack.c.h.b16 %v162
    %v180 = vunpack.c.l.b16 %v163
    %v181 = vunpack.c.h.b16 %v163
    %v182 = vunpack.c.l.b16 %v164
    %v183 = vunpack.c.h.b16 %v164
    %v184 = vunpack.c.l.b16 %v165
    %v185 = vunpack.c.h.b16 %v165
    %v186 = vunpack.c.l.b16 %v166
    %v187 = vunpack.c.h.b16 %v166
    %v188 = vunpack.c.l.b16 %v167
    %v189 = vunpack.c.h.b16 %v167
    %v190 = vunpack.c.l.b16 %v168
    %v191 = vunpack.c.h.b16 %v168
    %v192 = vunpack.c.l.b16 %v169
    %v193 = vunpack.c.h.b16 %v169
    %v194 = vpack.c.b16 %v180, %v178
    %v195 = vpack.c.b16 %v181, %v179
    %v196 = vpack.c.b16 %v184, %v182
    %v197 = vpack.c.b16 %v185, %v183
    %v198 = vpack.c.b16 %v188, %v186
    %v199 = vpack.c.b16 %v189, %v187
    %v200 = vpack.c.b16 %v192, %v190
    %v201 = vpack.c.b16 %v193, %v191
    %v211 = vsel %vm76, %v161, 0
    %213 = vmatprep.subr.bf16.mxu0 %v195
    %214 = vmatpush1.bf16.msra.mxu0 %v194
    %215 = vmatprep.subr.bf16.mxu0 %v197
    %216 = vmatpush1.bf16.msra.mxu0 %v196
    %217 = vmatprep.subr.bf16.mxu0 %v199
    %218 = vmatpush1.bf16.msra.mxu0 %v198
    %219 = vmatprep.subr.bf16.mxu0 %v201
    %220 = vmatpush1.bf16.msra.mxu0 %v200
    %221 = vmatprep.subr.bf16.mxu0 0
    %222 = vmatpush1.bf16.msra.mxu0 0
    %223 = vmatprep.subr.bf16.mxu0 0
    %224 = vmatpush1.bf16.msra.mxu0 0
    %225 = vmatprep.subr.bf16.mxu0 0
    %226 = vmatpush1.bf16.msra.mxu0 0
    %227 = vmatprep.subr.bf16.mxu0 0
    %228 = vmatpush1.bf16.msra.mxu0 0
    %229 = vmatprep.subr.bf16.mxu0 0
    %230 = vmatpush1.bf16.msra.mxu0 0
    %231 = vmatprep.subr.bf16.mxu0 0
    %232 = vmatpush1.bf16.msra.mxu0 0
    %233 = vmatprep.subr.bf16.mxu0 0
    %234 = vmatpush1.bf16.msra.mxu0 0
    %235 = vmatprep.subr.bf16.mxu0 0
    %236 = vmatpush1.bf16.msra.mxu0 0
    %237 = vmatprep.subr.bf16.mxu0 0
    %238 = vmatpush1.bf16.msra.mxu0 0
    %239 = vmatprep.subr.bf16.mxu0 0
    %240 = vmatpush1.bf16.msra.mxu0 0
    %241 = vmatprep.subr.bf16.mxu0 0
    %242 = vmatpush1.bf16.msra.mxu0 0
    %243 = vmatprep.subr.bf16.mxu0 0
    %244 = vmatpush1.bf16.msra.mxu0 0
    %245 = vmatprep.mubr.bf16.mxu0 0
    %246 = vmatmul.mubr.bf16.gmra.mrb[0].mxu0 %v211
    %v247 = vpop.f32.mrb[0].mxu0
    %v248 = vadd.f32 0.0, %v247
    %v249 = vpop.f32.mrb[0].mxu0
    %v250 = vadd.f32 0.0, %v249
    %v251 = vpop.f32.mrb[0].mxu0
    %v252 = vpop.f32.mrb[0].mxu0
    %253 = vdwg.mxu0
    %v262 = vunpack.c.l.b16 %v153
    %v263 = vunpack.c.h.b16 %v153
    %v264 = vunpack.c.l.b16 %v154
    %v265 = vunpack.c.h.b16 %v154
    %v266 = vunpack.c.l.b16 %v155
    %v267 = vunpack.c.h.b16 %v155
    %v268 = vunpack.c.l.b16 %v156
    %v269 = vunpack.c.h.b16 %v156
    %v270 = vunpack.c.l.b16 %v157
    %v271 = vunpack.c.h.b16 %v157
    %v272 = vunpack.c.l.b16 %v158
    %v273 = vunpack.c.h.b16 %v158
    %v274 = vunpack.c.l.b16 %v159
    %v275 = vunpack.c.h.b16 %v159
    %v276 = vunpack.c.l.b16 %v160
    %v277 = vunpack.c.h.b16 %v160
    %v278 = vpack.c.b16 %v264, %v262
    %v279 = vpack.c.b16 %v265, %v263
    %v280 = vpack.c.b16 %v268, %v266
    %v281 = vpack.c.b16 %v269, %v267
    %v282 = vpack.c.b16 %v272, %v270
    %v283 = vpack.c.b16 %v273, %v271
    %v284 = vpack.c.b16 %v276, %v274
    %v285 = vpack.c.b16 %v277, %v275
    %v295 = vsel %vm76, %v152, 0
    %297 = vmatprep.subr.bf16.mxu0 %v279
    %298 = vmatpush1.bf16.msra.mxu0 %v278
    %299 = vmatprep.subr.bf16.mxu0 %v281
    %300 = vmatpush1.bf16.msra.mxu0 %v280
    %301 = vmatprep.subr.bf16.mxu0 %v283
    %302 = vmatpush1.bf16.msra.mxu0 %v282
    %303 = vmatprep.subr.bf16.mxu0 %v285
    %304 = vmatpush1.bf16.msra.mxu0 %v284
    %305 = vmatprep.subr.bf16.mxu0 0
    %306 = vmatpush1.bf16.msra.mxu0 0
    %307 = vmatprep.subr.bf16.mxu0 0
    %308 = vmatpush1.bf16.msra.mxu0 0
    %309 = vmatprep.subr.bf16.mxu0 0
    %310 = vmatpush1.bf16.msra.mxu0 0
    %311 = vmatprep.subr.bf16.mxu0 0
    %312 = vmatpush1.bf16.msra.mxu0 0
    %313 = vmatprep.subr.bf16.mxu0 0
    %314 = vmatpush1.bf16.msra.mxu0 0
    %315 = vmatprep.subr.bf16.mxu0 0
    %316 = vmatpush1.bf16.msra.mxu0 0
    %317 = vmatprep.subr.bf16.mxu0 0
    %318 = vmatpush1.bf16.msra.mxu0 0
    %319 = vmatprep.subr.bf16.mxu0 0
    %320 = vmatpush1.bf16.msra.mxu0 0
    %321 = vmatprep.subr.bf16.mxu0 0
    %322 = vmatpush1.bf16.msra.mxu0 0
    %323 = vmatprep.subr.bf16.mxu0 0
    %324 = vmatpush1.bf16.msra.mxu0 0
    %325 = vmatprep.subr.bf16.mxu0 0
    %326 = vmatpush1.bf16.msra.mxu0 0
    %327 = vmatprep.subr.bf16.mxu0 0
    %328 = vmatpush1.bf16.msra.mxu0 0
    %329 = vmatprep.mubr.bf16.mxu0 0
    %330 = vmatmul.mubr.bf16.gmra.mrb[0].mxu0 %v295
    %v331 = vpop.f32.mrb[0].mxu0
    %v332 = vadd.f32 %v248, %v331
    %v333 = vpop.f32.mrb[0].mxu0
    %v334 = vadd.f32 %v250, %v333
    %v335 = vpop.f32.mrb[0].mxu0
    %v336 = vpop.f32.mrb[0].mxu0
    %337 = vdwg.mxu0
    %v338 = vld [vmem:[%s6] sm:$0x3]
    %v340 = vlaneseq
    %v341 = vshrl.u32 %v340, 7
    %v342 = vsub.s32 0, %v341
    %v343 = vrot.slane %v338, %v342
    %v344 = vlaneseq
    %v345 = vshrl.u32 %v344, 7
    %v346 = vsub.s32 1, %v345
    %v347 = vrot.slane %v338, %v346
    %v350 = vadd.f32 %v332, %v343
    %v351 = vadd.f32 %v334, %v347
    %v352 = vxor.u32 %v350, 2147483648
    %v353 = vmul.f32 %v352, 1.442695
    %v354 = vpow.pop %v353
    %v355 = vadd.f32 %v354, 1.0
    %v356 = vrcp.pop %v355
    %v357 = vmul.f32 1.0, %v356
    %v358 = vtanh.pop %v351
    %v359 = vxor.u32 %v351, 2147483648
    %v360 = vmul.f32 %v359, 1.442695
    %v361 = vpow.pop %v360
    %v362 = vadd.f32 %v361, 1.0
    %v363 = vrcp.pop %v362
    %v364 = vmul.f32 1.0, %v363
    %366 = vrot.lane.b32.xlu0 %v151, 64
    %v367 = vpop.permute.xlu0 %366
    %v369 = vmul.f32 %v357, %v367
    %v370 = vmul.f32 %v357, %v358
    %372 = vrot.lane.b32.xlu0 %v370, 64
    %v373 = vpop.permute.xlu0 %372
    %v375 = vadd.f32 %v369, %v373
    %v376 = vtanh.pop %v375
    %v377 = vmul.f32 %v364, %v376
    %v378 = vpack.c.bf16 %v377, %v377
    %s379 = scalar_lea.vmem %s4, 64
    %v380 = vld [vmem:[%s379] sm:$0xff]
    %v381 = vld [vmem:[%s379 + $0x8] sm:$0xff]
    %v382 = vld [vmem:[%s379 + $0x10] sm:$0xff]
    %v383 = vld [vmem:[%s379 + $0x18] sm:$0xff]
    %v384 = vld [vmem:[%s379 + $0x20] sm:$0xff]
    %v385 = vld [vmem:[%s379 + $0x28] sm:$0xff]
    %v386 = vld [vmem:[%s379 + $0x30] sm:$0xff]
    %v387 = vld [vmem:[%s379 + $0x38] sm:$0xff]
    %s388 = scalar_lea.vmem [#allocation4], 64
    %v389 = vld [vmem:[%s388] sm:$0xff]
    %v390 = vld [vmem:[%s388 + $0x8] sm:$0xff]
    %v391 = vld [vmem:[%s388 + $0x10] sm:$0xff]
    %v392 = vld [vmem:[%s388 + $0x18] sm:$0xff]
    %v393 = vld [vmem:[%s388 + $0x20] sm:$0xff]
    %v394 = vld [vmem:[%s388 + $0x28] sm:$0xff]
    %v395 = vld [vmem:[%s388 + $0x30] sm:$0xff]
    %v396 = vld [vmem:[%s388 + $0x38] sm:$0xff]
    %398 = vrot.lane.b32.xlu0 %v161, 64
    %v399 = vpop.permute.xlu0 %398
    %v408 = vunpack.c.l.b16 %v389
    %v409 = vunpack.c.h.b16 %v389
    %v410 = vunpack.c.l.b16 %v390
    %v411 = vunpack.c.h.b16 %v390
    %v412 = vunpack.c.l.b16 %v391
    %v413 = vunpack.c.h.b16 %v391
    %v414 = vunpack.c.l.b16 %v392
    %v415 = vunpack.c.h.b16 %v392
    %v416 = vunpack.c.l.b16 %v393
    %v417 = vunpack.c.h.b16 %v393
    %v418 = vunpack.c.l.b16 %v394
    %v419 = vunpack.c.h.b16 %v394
    %v420 = vunpack.c.l.b16 %v395
    %v421 = vunpack.c.h.b16 %v395
    %v422 = vunpack.c.l.b16 %v396
    %v423 = vunpack.c.h.b16 %v396
    %v424 = vpack.c.b16 %v410, %v408
    %v425 = vpack.c.b16 %v411, %v409
    %v426 = vpack.c.b16 %v414, %v412
    %v427 = vpack.c.b16 %v415, %v413
    %v428 = vpack.c.b16 %v418, %v416
    %v429 = vpack.c.b16 %v419, %v417
    %v430 = vpack.c.b16 %v422, %v420
    %v431 = vpack.c.b16 %v423, %v421
    %v441 = vsel %vm76, %v399, 0
    %443 = vmatprep.subr.bf16.mxu0 %v425
    %444 = vmatpush1.bf16.msra.mxu0 %v424
    %445 = vmatprep.subr.bf16.mxu0 %v427
    %446 = vmatpush1.bf16.msra.mxu0 %v426
    %447 = vmatprep.subr.bf16.mxu0 %v429
    %448 = vmatpush1.bf16.msra.mxu0 %v428
    %449 = vmatprep.subr.bf16.mxu0 %v431
    %450 = vmatpush1.bf16.msra.mxu0 %v430
    %451 = vmatprep.subr.bf16.mxu0 0
    %452 = vmatpush1.bf16.msra.mxu0 0
    %453 = vmatprep.subr.bf16.mxu0 0
    %454 = vmatpush1.bf16.msra.mxu0 0
    %455 = vmatprep.subr.bf16.mxu0 0
    %456 = vmatpush1.bf16.msra.mxu0 0
    %457 = vmatprep.subr.bf16.mxu0 0
    %458 = vmatpush1.bf16.msra.mxu0 0
    %459 = vmatprep.subr.bf16.mxu0 0
    %460 = vmatpush1.bf16.msra.mxu0 0
    %461 = vmatprep.subr.bf16.mxu0 0
    %462 = vmatpush1.bf16.msra.mxu0 0
    %463 = vmatprep.subr.bf16.mxu0 0
    %464 = vmatpush1.bf16.msra.mxu0 0
    %465 = vmatprep.subr.bf16.mxu0 0
    %466 = vmatpush1.bf16.msra.mxu0 0
    %467 = vmatprep.subr.bf16.mxu0 0
    %468 = vmatpush1.bf16.msra.mxu0 0
    %469 = vmatprep.subr.bf16.mxu0 0
    %470 = vmatpush1.bf16.msra.mxu0 0
    %471 = vmatprep.subr.bf16.mxu0 0
    %472 = vmatpush1.bf16.msra.mxu0 0
    %473 = vmatprep.subr.bf16.mxu0 0
    %474 = vmatpush1.bf16.msra.mxu0 0
    %475 = vmatprep.mubr.bf16.mxu0 0
    %476 = vmatmul.mubr.bf16.gmra.mrb[0].mxu0 %v441
    %v477 = vpop.f32.mrb[0].mxu0
    %v478 = vadd.f32 0.0, %v477
    %v479 = vpop.f32.mrb[0].mxu0
    %v480 = vadd.f32 0.0, %v479
    %v481 = vpop.f32.mrb[0].mxu0
    %v482 = vpop.f32.mrb[0].mxu0
    %483 = vdwg.mxu0
    %485 = vrot.lane.b32.xlu0 %v378, 64
    %v486 = vpop.permute.xlu0 %485
    %v495 = vunpack.c.l.b16 %v380
    %v496 = vunpack.c.h.b16 %v380
    %v497 = vunpack.c.l.b16 %v381
    %v498 = vunpack.c.h.b16 %v381
    %v499 = vunpack.c.l.b16 %v382
    %v500 = vunpack.c.h.b16 %v382
    %v501 = vunpack.c.l.b16 %v383
    %v502 = vunpack.c.h.b16 %v383
    %v503 = vunpack.c.l.b16 %v384
    %v504 = vunpack.c.h.b16 %v384
    %v505 = vunpack.c.l.b16 %v385
    %v506 = vunpack.c.h.b16 %v385
    %v507 = vunpack.c.l.b16 %v386
    %v508 = vunpack.c.h.b16 %v386
    %v509 = vunpack.c.l.b16 %v387
    %v510 = vunpack.c.h.b16 %v387
    %v511 = vpack.c.b16 %v497, %v495
    %v512 = vpack.c.b16 %v498, %v496
    %v513 = vpack.c.b16 %v501, %v499
    %v514 = vpack.c.b16 %v502, %v500
    %v515 = vpack.c.b16 %v505, %v503
    %v516 = vpack.c.b16 %v506, %v504
    %v517 = vpack.c.b16 %v509, %v507
    %v518 = vpack.c.b16 %v510, %v508
    %v528 = vsel %vm76, %v486, 0
    %530 = vmatprep.subr.bf16.mxu0 %v512
    %531 = vmatpush1.bf16.msra.mxu0 %v511
    %532 = vmatprep.subr.bf16.mxu0 %v514
    %533 = vmatpush1.bf16.msra.mxu0 %v513
    %534 = vmatprep.subr.bf16.mxu0 %v516
    %535 = vmatpush1.bf16.msra.mxu0 %v515
    %536 = vmatprep.subr.bf16.mxu0 %v518
    %537 = vmatpush1.bf16.msra.mxu0 %v517
    %538 = vmatprep.subr.bf16.mxu0 0
    %539 = vmatpush1.bf16.msra.mxu0 0
    %540 = vmatprep.subr.bf16.mxu0 0
    %541 = vmatpush1.bf16.msra.mxu0 0
    %542 = vmatprep.subr.bf16.mxu0 0
    %543 = vmatpush1.bf16.msra.mxu0 0
    %544 = vmatprep.subr.bf16.mxu0 0
    %545 = vmatpush1.bf16.msra.mxu0 0
    %546 = vmatprep.subr.bf16.mxu0 0
    %547 = vmatpush1.bf16.msra.mxu0 0
    %548 = vmatprep.subr.bf16.mxu0 0
    %549 = vmatpush1.bf16.msra.mxu0 0
    %550 = vmatprep.subr.bf16.mxu0 0
    %551 = vmatpush1.bf16.msra.mxu0 0
    %552 = vmatprep.subr.bf16.mxu0 0
    %553 = vmatpush1.bf16.msra.mxu0 0
    %554 = vmatprep.subr.bf16.mxu0 0
    %555 = vmatpush1.bf16.msra.mxu0 0
    %556 = vmatprep.subr.bf16.mxu0 0
    %557 = vmatpush1.bf16.msra.mxu0 0
    %558 = vmatprep.subr.bf16.mxu0 0
    %559 = vmatpush1.bf16.msra.mxu0 0
    %560 = vmatprep.subr.bf16.mxu0 0
    %561 = vmatpush1.bf16.msra.mxu0 0
    %562 = vmatprep.mubr.bf16.mxu0 0
    %563 = vmatmul.mubr.bf16.gmra.mrb[0].mxu0 %v528
    %v564 = vpop.f32.mrb[0].mxu0
    %v565 = vadd.f32 %v478, %v564
    %v566 = vpop.f32.mrb[0].mxu0
    %v567 = vadd.f32 %v480, %v566
    %v568 = vpop.f32.mrb[0].mxu0
    %v569 = vpop.f32.mrb[0].mxu0
    %570 = vdwg.mxu0
    %s571 = scalar_lea.vmem %s6, 2
    %v572 = vld [vmem:[%s571] sm:$0x3]
    %v574 = vlaneseq
    %v575 = vshrl.u32 %v574, 7
    %v576 = vsub.s32 0, %v575
    %v577 = vrot.slane %v572, %v576
    %v578 = vlaneseq
    %v579 = vshrl.u32 %v578, 7
    %v580 = vsub.s32 1, %v579
    %v581 = vrot.slane %v572, %v580
    %v584 = vadd.f32 %v565, %v577
    %v585 = vadd.f32 %v567, %v581
    %v586 = vxor.u32 %v584, 2147483648
    %v587 = vmul.f32 %v586, 1.442695
    %v588 = vpow.pop %v587
    %v589 = vadd.f32 %v588, 1.0
    %v590 = vrcp.pop %v589
    %v591 = vmul.f32 1.0, %v590
    %v592 = vtanh.pop %v585
    %v593 = vxor.u32 %v585, 2147483648
    %v594 = vmul.f32 %v593, 1.442695
    %v595 = vpow.pop %v594
    %v596 = vadd.f32 %v595, 1.0
    %v597 = vrcp.pop %v596
    %v598 = vmul.f32 1.0, %v597
    %v599 = vmul.f32 %v591, %v151
    %v600 = vmul.f32 %v591, %v592
    %602 = vrot.lane.b32.xlu0 %v600, 64
    %v603 = vpop.permute.xlu0 %602
    %v605 = vadd.f32 %v599, %v603
    %v606 = vtanh.pop %v605
    %v607 = vmul.f32 %v598, %v606
    %609 = vrot.lane.b32.xlu0 %v377, 64
    %v610 = vpop.permute.xlu0 %609
    %v612 = vsel %vm76, %v610, %v607
    %614 = vrot.lane.b32.xlu0 %v375, 64
    %v615 = vpop.permute.xlu0 %614
    %v617 = vsel %vm76, %v615, %v605
    %618 = vst [vmem:[#allocation2] sm:$0xff] %v612
    %619 = vst [vmem:[#allocation3] sm:$0xff] %v617
    %v620 = vpack.c.bf16 %v607, %v607
    %v621 = vld [vmem:[%s7] sm:$0xf]
    %v622 = vld [vmem:[%s7 + $0x4] sm:$0xf]
    %v623 = vld [vmem:[%s7 + $0x8] sm:$0xf]
    %v624 = vld [vmem:[%s7 + $0xc] sm:$0xf]
    %v625 = vld [vmem:[%s7 + $0x10] sm:$0xf]
    %v626 = vld [vmem:[%s7 + $0x14] sm:$0xf]
    %v627 = vld [vmem:[%s7 + $0x18] sm:$0xf]
    %v628 = vld [vmem:[%s7 + $0x1c] sm:$0xf]
    %v629 = vld [vmem:[%s8] sm:$0x1]
    %v631 = vlaneseq
    %v632 = vshrl.u32 %v631, 7
    %v633 = vsub.s32 0, %v632
    %v634 = vrot.slane %v629, %v633
    %637 = vrot.lane.b32.xlu0 %v620, 64
    %v638 = vpop.permute.xlu0 %637
    %v647 = vunpack.c.l.b16 %v621
    %v648 = vunpack.c.l.b16 %v622
    %v649 = vunpack.c.l.b16 %v623
    %v650 = vunpack.c.l.b16 %v624
    %v651 = vunpack.c.l.b16 %v625
    %v652 = vunpack.c.l.b16 %v626
    %v653 = vunpack.c.l.b16 %v627
    %v654 = vunpack.c.l.b16 %v628
    %v655 = vpack.c.b16 %v648, %v647
    %v656 = vpack.c.b16 %v650, %v649
    %v657 = vpack.c.b16 %v652, %v651
    %v658 = vpack.c.b16 %v654, %v653
    %v664 = vsel %vm76, %v638, 0
    %666 = vmatprep.subr.bf16.mxu0 0
    %667 = vmatpush1.bf16.msra.mxu0 %v655
    %668 = vmatprep.subr.bf16.mxu0 0
    %669 = vmatpush1.bf16.msra.mxu0 %v656
    %670 = vmatprep.subr.bf16.mxu0 0
    %671 = vmatpush1.bf16.msra.mxu0 %v657
    %672 = vmatprep.subr.bf16.mxu0 0
    %673 = vmatpush1.bf16.msra.mxu0 %v658
    %674 = vmatprep.subr.bf16.mxu0 0
    %675 = vmatpush1.bf16.msra.mxu0 0
    %676 = vmatprep.subr.bf16.mxu0 0
    %677 = vmatpush1.bf16.msra.mxu0 0
    %678 = vmatprep.subr.bf16.mxu0 0
    %679 = vmatpush1.bf16.msra.mxu0 0
    %680 = vmatprep.subr.bf16.mxu0 0
    %681 = vmatpush1.bf16.msra.mxu0 0
    %682 = vmatprep.subr.bf16.mxu0 0
    %683 = vmatpush1.bf16.msra.mxu0 0
    %684 = vmatprep.subr.bf16.mxu0 0
    %685 = vmatpush1.bf16.msra.mxu0 0
    %686 = vmatprep.subr.bf16.mxu0 0
    %687 = vmatpush1.bf16.msra.mxu0 0
    %688 = vmatprep.subr.bf16.mxu0 0
    %689 = vmatpush1.bf16.msra.mxu0 0
    %690 = vmatprep.subr.bf16.mxu0 0
    %691 = vmatpush1.bf16.msra.mxu0 0
    %692 = vmatprep.subr.bf16.mxu0 0
    %693 = vmatpush1.bf16.msra.mxu0 0
    %694 = vmatprep.subr.bf16.mxu0 0
    %695 = vmatpush1.bf16.msra.mxu0 0
    %696 = vmatprep.subr.bf16.mxu0 0
    %697 = vmatpush1.bf16.msra.mxu0 0
    %698 = vmatprep.mubr.bf16.mxu0 0
    %699 = vmatmul.mubr.bf16.gmra.mrb[0].mxu0 %v664
    %v700 = vpop.f32.mrb[0].mxu0
    %v701 = vadd.f32 %v634, %v700
    %v702 = vpop.f32.mrb[0].mxu0
    %v703 = vpop.f32.mrb[0].mxu0
    %v704 = vpop.f32.mrb[0].mxu0
    %705 = vdwg.mxu0
    %706 = vst [vmem:[#allocation7] sm:$0xff] %v701
    // Predicated region
    $region46: #{decoder_decode.1} parent=1 // pred_check
      %p707 = pneg %p51
    $region47: #{decoder_decode.1} parent=1 // pred_check_branch
      %709 = sbr.rel (%p707) target = $region49
    $region48: #{decoder_decode.1} parent=1 // pred_region
      %710 = vst [vmem:[%s10] sm:$0xff] %v612
      %711 = vst [vmem:[%s11] sm:$0xff] %v617
    $region49: #{decoder_decode.1} parent=1 // pred_fallthru
      _
    // Predicated region
    $region50: #{decoder_decode.1} parent=1 // pred_check
      _
    $region51: #{decoder_decode.1} parent=1 // pred_check_branch
      %713 = sbr.rel (0) target = $region53
    $region52: #{decoder_decode.1} parent=1 // pred_region
      %s715 = ssub.s32 128, 128
      %716 = vsyncadd [#allocation6], %s715
      %s718 = sshll.u32 [#allocation7], 4
      %s719 = int_to_ptr.vmem [resolvable:$true] %s718
      %721 = dma.vmem_to_hbm [thread:$0]  %s719, 128, %s9, [#allocation6]
    $region53: #{decoder_decode.1} parent=1 // pred_fallthru
      _
    // Predicated region
    $region54: #{decoder_decode.1} parent=1 // pred_check
      _
    $region55: #{decoder_decode.1} parent=1 // pred_check_branch
      %723 = sbr.rel (0) target = $region57
    $region56: #{decoder_decode.1} parent=1 // pred_region
      _
    $region57: #{decoder_decode.1} parent=1 // pred_fallthru
      _
    // Predicated region
    $region58: #{decoder_decode.1} parent=1 // pred_check
      _
    $region59: #{decoder_decode.1} parent=1 // pred_check_branch
      %725 = sbr.rel (0) target = $region61
    $region60: #{decoder_decode.1} parent=1 // pred_region
      _
    $region61: #{decoder_decode.1} parent=1 // pred_fallthru
      _
    // Predicated region
    $region62: #{decoder_decode.1} parent=1 // pred_check
      _
    $region63: #{decoder_decode.1} parent=1 // pred_check_branch
      %727 = sbr.rel (0) target = $region65
    $region64: #{decoder_decode.1} parent=1 // pred_region
      %728 = dma.done [#allocation6], 128
    $region65: #{decoder_decode.1} parent=1 // pred_fallthru
      _
    // Predicated region
    $region66: #{decoder_decode.1} parent=1 // pred_check
      _
    $region67: #{decoder_decode.1} parent=1 // pred_check_branch
      %730 = sbr.rel (0) target = $region69
    $region68: #{decoder_decode.1} parent=1 // pred_region
      _
    $region69: #{decoder_decode.1} parent=1 // pred_fallthru
      _
    // Predicated region
    $region70: #{decoder_decode.1} parent=1 // pred_check
      _
    $region71: #{decoder_decode.1} parent=1 // pred_check_branch
      %732 = sbr.rel (0) target = $region73
    $region72: #{decoder_decode.1} parent=1 // pred_region
      _
    $region73: #{decoder_decode.1} parent=1 // pred_fallthru
      _
    %733 = vsyncpa [#allocation5], 1
    %734 = vsyncpa [#allocation6], 1

</llo_original>
